<compile_context>
chip_gen: v7x
topology: tpu7x:2x2x1
jax: 0.10.0
libtpu: 0.0.40
codegen_flags: <defaults>
</compile_context>

<pallas_src>
import functools

import jax
import jax.numpy as jnp
from jax.experimental import pallas as pl
from jax.experimental.pallas import tpu as pltpu


def _round_up(x, m):
    return (x + m - 1) // m * m


def _pick_batch_tile(b, tb_max):
    """Largest multiple-of-8 tile <= tb_max that minimizes batch padding."""
    hi = min(tb_max, _round_up(b, 8))
    best_pad, best_t = None, 8
    for t in range(8, hi + 1, 8):
        pad = _round_up(b, t) - b
        if best_pad is None or pad < best_pad or (pad == best_pad and t > best_t):
            best_pad, best_t = pad, t
    return best_t


def _query_step_kernel(z_ref, cb_ref, neg2_cbt_t_ref, cbt_sq_ref,
                       zq_ref, maps_ref,
                       residual_sc, zq_sc, *, n_valid):
    """One (batch-tile, depth-step) grid point of the RVQ query loop.

    z_ref:          (TB, d_pad)     input tile (read only at k == 0)
    cb_ref:         (N_pad, d_pad)  codebook (resident across grid steps)
    neg2_cbt_t_ref: (d_pad, N_pad)  -2 * codebook_transform^T (resident)
    cbt_sq_ref:     (1, N_pad)      ||y||^2 per code (resident)
    zq_ref:         (TB, d_pad)     quantized output tile (written at last k)
    maps_ref:       (1, TB, N_pad)  distance map for this depth step
    residual_sc/zq_sc: VMEM scratch carried across the depth grid axis.
    """
    k = pl.program_id(1)

    @pl.when(k == 0)
    def _():
        residual_sc[...] = z_ref[...]
        zq_sc[...] = jnp.zeros_like(zq_sc)

    residual = residual_sc[...]                              # (TB, d_pad) f32
    tb = residual.shape[0]
    n_pad = cbt_sq_ref.shape[1]

    # dist(x, y) = ||x||^2 + ||y||^2 - 2 x.y^T   -> (TB, N_pad)
    # ||y||^2 and the -2 scale were folded into the inputs at param-prep time.
    x_sq = jnp.sum(residual * residual, axis=1, keepdims=True)            # (TB, 1)
    cross = jnp.dot(residual, neg2_cbt_t_ref[...],
                    preferred_element_type=jnp.float32)                   # (TB, N_pad)
    dist = x_sq + cbt_sq_ref[...] + cross

    maps_ref[0] = dist                                       # lane-dense full-width store

    # argmin over valid codes (first occurrence on ties, like torch.argmin).
    col_iota = jax.lax.broadcasted_iota(jnp.int32, (tb, n_pad), 1)
    if n_valid < n_pad:
        dist_am = jnp.where(col_iota < n_valid, dist, jnp.inf)
    else:
        dist_am = dist
    min_val = jnp.min(dist_am, axis=1, keepdims=True)                     # (TB, 1)
    pred = jnp.min(jnp.where(dist_am == min_val, col_iota, n_pad), axis=1)  # (TB,)

    # one_hot(pred) @ codebook  -> selected code rows (TB, d_pad) via MXU.
    one_hot = (col_iota == pred[:, None]).astype(jnp.float32)             # (TB, N_pad)
    delta = jnp.dot(one_hot, cb_ref[...], preferred_element_type=jnp.float32)

    zq_sc[...] = zq_sc[...] + delta
    residual_sc[...] = residual - delta

    @pl.when(k == pl.num_programs(1) - 1)
    def _():
        zq_ref[...] = zq_sc[...]


def prepare_query_params(codebook, codebook_transform):
    """One-time ("module init") padding / transpose / precompute of the static params."""
    codebook = codebook.astype(jnp.float32)
    codebook_transform = codebook_transform.astype(jnp.float32)
    n, d = codebook.shape

    d_pad = _round_up(d, 128)
    n_pad = _round_up(n, 128)

    cb_p = jnp.zeros((n_pad, d_pad), jnp.float32).at[:n, :d].set(codebook)
    # Pre-transposed and pre-scaled by -2: no per-step XLU transpose or VPU scale
    # inside the kernel.
    neg2_cbt_t_p = (jnp.zeros((d_pad, n_pad), jnp.float32)
                    .at[:d, :n].set(-2.0 * codebook_transform.T))
    # ||y||^2 per code, computed once here instead of per grid step.
    cbt_sq_p = (jnp.zeros((1, n_pad), jnp.float32)
                .at[0, :n].set(jnp.sum(codebook_transform * codebook_transform, axis=1)))

    return dict(cb_p=cb_p, neg2_cbt_t_p=neg2_cbt_t_p, cbt_sq_p=cbt_sq_p,
                N=n, d=d, n_pad=n_pad, d_pad=d_pad)


def query_module_forward(z, params, depth, *, tb_max=256):
    """Pallas forward.  Returns (z_q (B, d), maps (depth, B, N))."""
    z = z.astype(jnp.float32)
    B, d = z.shape
    assert d == params["d"]
    N, n_pad, d_pad = params["N"], params["n_pad"], params["d_pad"]

    tb = _pick_batch_tile(B, tb_max)
    b_pad = _round_up(B, tb)

    z_p = jnp.zeros((b_pad, d_pad), jnp.float32).at[:B, :d].set(z)

    grid = (b_pad // tb, depth)

    # VMEM budget: double-buffered z / z_q / maps tiles, resident codebook terms,
    # scratch, plus (TB, N_pad) intermediates.  Clamped to 56 MiB so it fits
    # v7x's 64 MiB per-TC VMEM with headroom (v5e/v6e have 128 MiB).
    tile_bytes = 4 * (2 * tb * d_pad      # z (double-buffered)
                      + 2 * tb * d_pad    # z_q (double-buffered)
                      + 2 * tb * n_pad    # maps block (double-buffered)
                      + 2 * tb * d_pad)   # residual + z_q scratch
    resident_bytes = 4 * 2 * (2 * n_pad * d_pad + n_pad)
    work_bytes = 4 * 6 * tb * n_pad
    vmem_limit = int(min(56 << 20,
                         max(24 << 20, 2 * (tile_bytes + resident_bytes + work_bytes))))

    kernel = functools.partial(_query_step_kernel, n_valid=N)

    z_q, maps = pl.pallas_call(
        kernel,
        out_shape=(
            jax.ShapeDtypeStruct((b_pad, d_pad), jnp.float32),
            jax.ShapeDtypeStruct((depth, b_pad, n_pad), jnp.float32),
        ),
        grid=grid,
        in_specs=[
            pl.BlockSpec((tb, d_pad), lambda b, k: (b, 0)),      # z: tiled on batch
            pl.BlockSpec((n_pad, d_pad), lambda b, k: (0, 0)),   # codebook: resident
            pl.BlockSpec((d_pad, n_pad), lambda b, k: (0, 0)),   # -2*transform^T: resident
            pl.BlockSpec((1, n_pad), lambda b, k: (0, 0)),       # ||y||^2: resident
        ],
        out_specs=(
            pl.BlockSpec((tb, d_pad), lambda b, k: (b, 0)),      # z_q: resident over depth
            pl.BlockSpec((1, tb, n_pad), lambda b, k: (k, b, 0)),  # maps: per-depth slab
        ),
        scratch_shapes=[
            pltpu.VMEM((tb, d_pad), jnp.float32),   # residual carried across depth
            pltpu.VMEM((tb, d_pad), jnp.float32),   # z_q accumulator
        ],
        compiler_params=pltpu.CompilerParams(
            dimension_semantics=("parallel", "arbitrary"),
            vmem_limit_bytes=vmem_limit,
        ),
    )(z_p, params["cb_p"], params["neg2_cbt_t_p"], params["cbt_sq_p"])

    # Strip padding (could be skipped downstream to save one HBM round-trip).
    return z_q[:B, :d], maps[:, :B, :N]


def _reference(z, codebook, codebook_transform, depth):
    """Pure-JAX reference mirroring the PyTorch forward."""
    residual = z.astype(jnp.float32)
    z_q = jnp.zeros_like(residual)
    N = codebook.shape[0]
    maps = []
    for _ in range(depth):
        dist = (jnp.sum(residual ** 2, axis=1, keepdims=True)
                + jnp.sum(codebook_transform ** 2, axis=1)
                - 2.0 * residual @ codebook_transform.T)
        maps.append(dist)
        pred = jnp.argmin(dist, axis=1)
        one_hot = jax.nn.one_hot(pred, N, dtype=jnp.float32)
        delta = one_hot @ codebook
        z_q = z_q + delta
        residual = residual - delta
    return z_q, jnp.stack(maps, axis=0)


if __name__ == "__main__":
    B, d, N, depth = 8, 32, 16, 3

    key = jax.random.PRNGKey(0)
    kz, kc, kt = jax.random.split(key, 3)
    z = jax.random.normal(kz, (B, d), dtype=jnp.float32)
    codebook = jax.random.normal(kc, (N, d), dtype=jnp.float32)
    # TODO(synk): codebook_transform is assigned externally in the original
    # module (None in __init__); here it is a deterministic synthetic parameter
    # of the same shape.
    codebook_transform = jax.random.normal(kt, (N, d), dtype=jnp.float32)

    params = prepare_query_params(codebook, codebook_transform)  # once, at init
    z_q, maps = query_module_forward(z, params, depth)
    jax.block_until_ready((z_q, maps))

    z_q_ref, maps_ref = _reference(z, codebook, codebook_transform, depth)
    assert z_q.shape == (B, d) and maps.shape == (depth, B, N)
    assert jnp.allclose(z_q, z_q_ref, atol=5e-4, rtol=1e-4), "z_q mismatch vs reference"
    assert jnp.allclose(maps, maps_ref, atol=5e-4, rtol=1e-4), "dist maps mismatch vs reference"

    print("KERNEL_OK")
</pallas_src>

<mosaic_0001>
module attributes {stable_mosaic.version = 11 : i64} {
  func.func @_query_step_kernel(%arg0: i32, %arg1: i32, %arg2: memref<8x128xf32, #tpu.memory_space<vmem>>, %arg3: memref<128x128xf32, #tpu.memory_space<vmem>>, %arg4: memref<128x128xf32, #tpu.memory_space<vmem>>, %arg5: memref<1x128xf32, #tpu.memory_space<vmem>>, %arg6: memref<8x128xf32, #tpu.memory_space<vmem>>, %arg7: memref<1x8x128xf32, #tpu.memory_space<vmem>>, %arg8: memref<8x128xf32, #tpu.memory_space<vmem>>, %arg9: memref<8x128xf32, #tpu.memory_space<vmem>>) attributes {dimension_semantics = [#tpu.dimension_semantics<parallel>, #tpu.dimension_semantics<arbitrary>], iteration_bounds = array<i64: 1, 3>, scalar_prefetch = 0 : i64, scratch_operands = 2 : i64, tpu.core_type = #tpu.core_type<tc>, window_params = [{transform_indices = @transform_0, window_bounds = array<i64: 8, 128>}, {pipeline_mode = #tpu.pipeline_mode<synchronous>, transform_indices = @transform_1, window_bounds = array<i64: 128, 128>}, {pipeline_mode = #tpu.pipeline_mode<synchronous>, transform_indices = @transform_2, window_bounds = array<i64: 128, 128>}, {pipeline_mode = #tpu.pipeline_mode<synchronous>, transform_indices = @transform_3, window_bounds = array<i64: 1, 128>}, {transform_indices = @transform_4, window_bounds = array<i64: 8, 128>}, {transform_indices = @transform_5, window_bounds = array<i64: 1, 8, 128>}]} {
    %c0_i32 = arith.constant 0 : i32
    %0 = arith.cmpi eq, %arg1, %c0_i32 : i32
    %1 = arith.extui %0 : i1 to i32
    %c0_i32_0 = arith.constant 0 : i32
    %2 = arith.cmpi ne, %1, %c0_i32_0 : i32
    scf.if %2 {
      %c0_23 = arith.constant 0 : index
      %c0_24 = arith.constant 0 : index
      %44 = vector.load %arg2[%c0_23, %c0_24] : memref<8x128xf32, #tpu.memory_space<vmem>>, vector<8x128xf32>
      %c0_25 = arith.constant 0 : index
      %c0_26 = arith.constant 0 : index
      %45 = vector.load %arg8[%c0_25, %c0_26] : memref<8x128xf32, #tpu.memory_space<vmem>>, vector<8x128xf32>
      tpu.vector_store %arg8[%c0_25, %c0_26], %44 {strides = array<i32>} : memref<8x128xf32, #tpu.memory_space<vmem>>, vector<8x128xf32>,
      %cst_27 = arith.constant 0.000000e+00 : f32
      %46 = vector.broadcast %cst_27 : f32 to vector<8x128xf32>
      %c0_28 = arith.constant 0 : index
      %c0_29 = arith.constant 0 : index
      %47 = vector.load %arg9[%c0_28, %c0_29] : memref<8x128xf32, #tpu.memory_space<vmem>>, vector<8x128xf32>
      tpu.vector_store %arg9[%c0_28, %c0_29], %46 {strides = array<i32>} : memref<8x128xf32, #tpu.memory_space<vmem>>, vector<8x128xf32>,
    } else {
    }
    %c0 = arith.constant 0 : index
    %c0_1 = arith.constant 0 : index
    %3 = vector.load %arg8[%c0, %c0_1] : memref<8x128xf32, #tpu.memory_space<vmem>>, vector<8x128xf32>
    %4 = arith.mulf %3, %3 : vector<8x128xf32>
    %cst = arith.constant dense<0.000000e+00> : vector<8xf32>
    %5 = vector.multi_reduction <add>, %4, %cst [1] : vector<8x128xf32> to vector<8xf32>
    %6 = vector.shape_cast %5 : vector<8xf32> to vector<8x1xf32>
    %c0_2 = arith.constant 0 : index
    %c0_3 = arith.constant 0 : index
    %7 = vector.load %arg4[%c0_2, %c0_3] : memref<128x128xf32, #tpu.memory_space<vmem>>, vector<128x128xf32>
    %cst_4 = arith.constant dense<0.000000e+00> : vector<8x128xf32>
    %8 = tpu.matmul %3, %7, %cst_4 {dimension_numbers = #tpu.dot_dimension_numbers<[1], [0], [0], [1], [0, 0, 1, 1], [], []>} : vector<8x128xf32>, vector<128x128xf32>, vector<8x128xf32> -> vector<8x128xf32>
    %c0_5 = arith.constant 0 : index
    %c0_6 = arith.constant 0 : index
    %9 = vector.load %arg5[%c0_5, %c0_6] : memref<1x128xf32, #tpu.memory_space<vmem>>, vector<1x128xf32>
    %10 = vector.broadcast %6 : vector<8x1xf32> to vector<8x128xf32>
    %11 = vector.broadcast %9 : vector<1x128xf32> to vector<8x128xf32>
    %12 = arith.addf %10, %11 : vector<8x128xf32>
    %13 = arith.addf %12, %8 : vector<8x128xf32>
    %c0_7 = arith.constant 0 : index
    %c0_8 = arith.constant 0 : index
    %c0_9 = arith.constant 0 : index
    %14 = vector.load %arg7[%c0_7, %c0_8, %c0_9] : memref<1x8x128xf32, #tpu.memory_space<vmem>>, vector<1x8x128xf32>
    %15 = vector.shape_cast %14 : vector<1x8x128xf32> to vector<8x128xf32>
    %16 = vector.shape_cast %13 : vector<8x128xf32> to vector<1x8x128xf32>
    tpu.vector_store %arg7[%c0_7, %c0_8, %c0_9], %16 {strides = array<i32>} : memref<1x8x128xf32, #tpu.memory_space<vmem>>, vector<1x8x128xf32>,
    %17 = tpu.iota {dimensions = array<i32: 1>} : vector<8x128xi32>
    %c16_i32 = arith.constant 16 : i32
    %18 = vector.broadcast %c16_i32 : i32 to vector<8x128xi32>
    %19 = arith.cmpi slt, %17, %18 : vector<8x128xi32>
    %cst_10 = arith.constant 0x7F800000 : f32
    %20 = vector.broadcast %cst_10 : f32 to vector<8x128xf32>
    %21 = arith.select %19, %13, %20 : vector<8x128xi1>, vector<8x128xf32>
    %cst_11 = arith.constant dense<0x7F800000> : vector<8xf32>
    %22 = vector.multi_reduction <minimumf>, %21, %cst_11 [1] : vector<8x128xf32> to vector<8xf32>
    %23 = vector.shape_cast %22 : vector<8xf32> to vector<8x1xf32>
    %24 = vector.broadcast %23 : vector<8x1xf32> to vector<8x128xf32>
    %25 = arith.cmpf oeq, %21, %24 : vector<8x128xf32>
    %c128_i32 = arith.constant 128 : i32
    %26 = vector.broadcast %c128_i32 : i32 to vector<8x128xi32>
    %27 = arith.select %25, %17, %26 : vector<8x128xi1>, vector<8x128xi32>
    %cst_12 = arith.constant dense<2147483647> : vector<8xi32>
    %28 = vector.multi_reduction <minsi>, %27, %cst_12 [1] : vector<8x128xi32> to vector<8xi32>
    %29 = vector.shape_cast %28 : vector<8xi32> to vector<8x1xi32>
    %30 = vector.broadcast %29 : vector<8x1xi32> to vector<8x128xi32>
    %31 = arith.cmpi eq, %17, %30 : vector<8x128xi32>
    %32 = arith.extui %31 : vector<8x128xi1> to vector<8x128xi32>
    %33 = arith.sitofp %32 : vector<8x128xi32> to vector<8x128xf32>
    %c0_13 = arith.constant 0 : index
    %c0_14 = arith.constant 0 : index
    %34 = vector.load %arg3[%c0_13, %c0_14] : memref<128x128xf32, #tpu.memory_space<vmem>>, vector<128x128xf32>
    %cst_15 = arith.constant dense<0.000000e+00> : vector<8x128xf32>
    %35 = tpu.matmul %33, %34, %cst_15 {dimension_numbers = #tpu.dot_dimension_numbers<[1], [0], [0], [1], [0, 0, 1, 1], [], []>} : vector<8x128xf32>, vector<128x128xf32>, vector<8x128xf32> -> vector<8x128xf32>
    %c0_16 = arith.constant 0 : index
    %c0_17 = arith.constant 0 : index
    %36 = vector.load %arg9[%c0_16, %c0_17] : memref<8x128xf32, #tpu.memory_space<vmem>>, vector<8x128xf32>
    %37 = arith.addf %36, %35 : vector<8x128xf32>
    %c0_18 = arith.constant 0 : index
    %c0_19 = arith.constant 0 : index
    %38 = vector.load %arg9[%c0_18, %c0_19] : memref<8x128xf32, #tpu.memory_space<vmem>>, vector<8x128xf32>
    tpu.vector_store %arg9[%c0_18, %c0_19], %37 {strides = array<i32>} : memref<8x128xf32, #tpu.memory_space<vmem>>, vector<8x128xf32>,
    %39 = arith.subf %3, %35 : vector<8x128xf32>
    %c0_20 = arith.constant 0 : index
    %c0_21 = arith.constant 0 : index
    %40 = vector.load %arg8[%c0_20, %c0_21] : memref<8x128xf32, #tpu.memory_space<vmem>>, vector<8x128xf32>
    tpu.vector_store %arg8[%c0_20, %c0_21], %39 {strides = array<i32>} : memref<8x128xf32, #tpu.memory_space<vmem>>, vector<8x128xf32>,
    %c2_i32 = arith.constant 2 : i32
    %41 = arith.cmpi eq, %arg1, %c2_i32 : i32
    %42 = arith.extui %41 : i1 to i32
    %c0_i32_22 = arith.constant 0 : i32
    %43 = arith.cmpi ne, %42, %c0_i32_22 : i32
    scf.if %43 {
      %c0_23 = arith.constant 0 : index
      %c0_24 = arith.constant 0 : index
      %44 = vector.load %arg9[%c0_23, %c0_24] : memref<8x128xf32, #tpu.memory_space<vmem>>, vector<8x128xf32>
      %c0_25 = arith.constant 0 : index
      %c0_26 = arith.constant 0 : index
      %45 = vector.load %arg6[%c0_25, %c0_26] : memref<8x128xf32, #tpu.memory_space<vmem>>, vector<8x128xf32>
      tpu.vector_store %arg6[%c0_25, %c0_26], %44 {strides = array<i32>} : memref<8x128xf32, #tpu.memory_space<vmem>>, vector<8x128xf32>,
    } else {
    }
    return
  }
  func.func @transform_0(%arg0: i32, %arg1: i32) -> (i32, i32) {
    %c0_i32 = arith.constant 0 : i32
    %c0_i32_0 = arith.constant 0 : i32
    return %arg0, %c0_i32 : i32, i32
  }
  func.func @transform_1(%arg0: i32, %arg1: i32) -> (i32, i32) {
    %c0_i32 = arith.constant 0 : i32
    %c0_i32_0 = arith.constant 0 : i32
    %c0_i32_1 = arith.constant 0 : i32
    return %c0_i32, %c0_i32_0 : i32, i32
  }
  func.func @transform_2(%arg0: i32, %arg1: i32) -> (i32, i32) {
    %c0_i32 = arith.constant 0 : i32
    %c0_i32_0 = arith.constant 0 : i32
    %c0_i32_1 = arith.constant 0 : i32
    return %c0_i32, %c0_i32_0 : i32, i32
  }
  func.func @transform_3(%arg0: i32, %arg1: i32) -> (i32, i32) {
    %c0_i32 = arith.constant 0 : i32
    %c0_i32_0 = arith.constant 0 : i32
    %c0_i32_1 = arith.constant 0 : i32
    return %c0_i32, %c0_i32_0 : i32, i32
  }
  func.func @transform_4(%arg0: i32, %arg1: i32) -> (i32, i32) {
    %c0_i32 = arith.constant 0 : i32
    %c0_i32_0 = arith.constant 0 : i32
    return %arg0, %c0_i32 : i32, i32
  }
  func.func @transform_5(%arg0: i32, %arg1: i32) -> (i32, i32, i32) {
    %c0_i32 = arith.constant 0 : i32
    %c0_i32_0 = arith.constant 0 : i32
    return %arg1, %arg0, %c0_i32 : i32, i32, i32
  }
}

</mosaic_0001>

<llo_original>
// kernel: tpu_custom_call.1
$region0: #{tpu_custom_call.1}
  #allocation0 [shape = 'u32[]', space=smem, size = 0x4, offset = 0x4, fixed_abs, tag = 'smem constant byte address 0x4 - core index']
  #allocation1 [shape = 'u32[144,128]{1,0:T(1,128)}', space=vmem, size = 0x12000, scoped, tag = 'internal scratch']
  #allocation2 [shape = 'f32[8,128]{1,0:T(8,128)}', space=vmem, size = 0x1000, scoped, tag = 'scratch operand']
  #allocation3 [shape = 'f32[8,128]{1,0:T(8,128)}', space=vmem, size = 0x1000, scoped, tag = 'scratch operand']
  %s0 = inlined_call_operand.hbm [shape: f32[8,128], index: 0, kind: input, shape index: {}]
  %s1 = inlined_call_operand.hbm [shape: f32[128,128], index: 1, kind: input, shape index: {}]
  %s2 = inlined_call_operand.hbm [shape: f32[128,128], index: 2, kind: input, shape index: {}]
  %s3 = inlined_call_operand.vmem [shape: f32[1,128], index: 3, kind: input, shape index: {}]
  %s4 = inlined_call_operand.hbm [shape: f32[8,128], index: 4, kind: output, shape index: {0}]
  %s5 = inlined_call_operand.hbm [shape: f32[3,8,128], index: 5, kind: output, shape index: {1}]
  %6 = xla_tuple %s4, %s5
  %s7 = sld [smem:[#allocation0]]
  $region77: #{tpu_custom_call.1} parent=0
    _
  %s9 = ssub.s32 1, %s7
  %s10 = scalar_select 0, %s9, %s7
  $region1: #{tpu_custom_call.1} parent=0
    #allocation4 [shape = 'u8[4096]{0}', space=vmem, size = 0x1000, scoped, tag = 'input window, operand 0, single buffered']
    #allocation5 [shape = 's32[2]{0}', space=sflag, size = 0x8, scoped, tag = 'scoped memory for tpu_custom_call.1']
    #allocation6 [shape = 's32[2]{0}', space=sflag, size = 0x8, scoped, tag = 'scoped memory for tpu_custom_call.1']
    #allocation7 [shape = 'u8[65536]{0}', space=vmem, size = 0x10000, scoped, tag = 'input window, operand 1, single buffered']
    #allocation8 [shape = 's32[1]{0}', space=sflag, size = 0x4, scoped, tag = 'scoped memory for tpu_custom_call.1']
    #allocation9 [shape = 'u8[65536]{0}', space=vmem, size = 0x10000, scoped, tag = 'input window, operand 2, single buffered']
    #allocation10 [shape = 'u8[4096]{0}', space=vmem, size = 0x1000, scoped, tag = 'output window, operand 0, single buffered']
    #allocation11 [shape = 'u8[8192]{0}', space=vmem, size = 0x2000, scoped, tag = 'output window, operand 1']
    #allocation12 [shape = 's32[2]{0}', space=sflag, size = 0x8, scoped, tag = 'scoped memory for tpu_custom_call.1']
    %11 = vsyncpa [#allocation5], 0
    %12 = vsyncpa [#allocation8], 0
    %13 = vsyncpa [#allocation6], 0
    %14 = vsyncpa [#allocation12], 0
    %s15 = scalar_lea.sflag [#allocation12], 1
    %16 = vsyncpa %s15, 0
    loop: start=0, step=1, limit=5
    $region2: #{tpu_custom_call.1} parent=1 // loop_pre_header
      _
    $region3: #{tpu_custom_call.1} parent=1 // loop_header
      %s18 = sphi 0, %s22
      %p19 = scmp.ge.s32.totalorder %s18, 5
      %s25 = sphi 0, %s37
      %s26 = sphi 0, %s33
      %s27 = sphi 0, %s25
      %s28 = sphi 0, %s26
      %s29 = sphi 0, %s27
      %s30 = sphi 0, %s28
      %s40 = sphi 0, %s42
      %s43 = sphi 0, %s40
      %s44 = sphi 0, %s43
      %s60 = sphi 0, %s44
      %s64 = sphi 0, %s64
      %s66 = sphi 0, %s64
      %s67 = sphi 0, %s66
      %s81 = sphi 0, %s67
      %s85 = sphi 0, %s85
      %s87 = sphi 0, %s85
      %s88 = sphi 0, %s87
      %s102 = sphi 0, %s88
      %s106 = sphi 0, %s106
      %s108 = sphi 0, %s106
      %s109 = sphi 0, %s108
      %s123 = sphi 0, %s109
      %s129 = sphi 0, %s131
      %s132 = sphi 0, %s129
      %s133 = sphi 0, %s132
      %s149 = sphi 0, %s133
      %s157 = sphi 0, %s159
      %s160 = sphi 0, %s157
      %s161 = sphi 0, %s160
      %s177 = sphi 0, %s161
    $region4: #{tpu_custom_call.1} parent=1 // loop_header_branch
      %21 = sbr.rel (%p19) target = $region8
    $region5: #{tpu_custom_call.1} parent=1 // loop_body
      %s23 = ssub.s32 %s18, 1
      %s24 = ssub.s32 %s18, 2
      %s31 = sadd.s32 1, %s26
      %p32 = scmp.ge.s32.totalorder %s31, 3
      %s33 = scalar_select %p32, 0, %s31
      %s34 = sadd.s32 1, %s25
      %s35 = scalar_select %p32, %s34, %s25
      %p36 = scmp.ge.s32.totalorder %s35, 1
      %s37 = scalar_select %p36, 0, %s35
      %s38 = ssub.s32 %s25, %s37
      %p39 = scmp.eq.s32.totalorder %s38, 0
      %s41 = sadd.s32 %s40, 1
      %s42 = scalar_select %p39, %s40, %s41
      %p45 = pneg %p39
      %p46 = scmp.eq.s32.totalorder %s18, 2
      %p47 = por %p45, %p46
      %p48 = scmp.ne.s32.totalorder %s40, %s43
      %p49 = scmp.eq.s32.totalorder %s18, 0
      %p50 = por %p48, %p49
      %p51 = scmp.ne.s32.totalorder %s40, %s43
      %p52 = scmp.eq.s32.totalorder %s23, 2
      %p53 = por %p51, %p52
      %p54 = scmp.ne.s32.totalorder %s43, %s44
      %p55 = scmp.eq.s32.totalorder %s23, 0
      %p56 = por %p54, %p55
      %p57 = scmp.ne.s32.totalorder %s43, %s44
      %p58 = scmp.eq.s32.totalorder %s24, 2
      %p59 = por %p57, %p58
      %p61 = scmp.ne.s32.totalorder %s44, %s60
      %p62 = scmp.eq.s32.totalorder %s24, 0
      %p63 = por %p61, %p62
      %s65 = sadd.s32 %s64, 1
      %p68 = scmp.eq.s32.totalorder %s18, 2
      %p69 = scmp.ne.s32.totalorder %s64, %s66
      %p70 = scmp.eq.s32.totalorder %s18, 0
      %p71 = por %p69, %p70
      %p72 = scmp.ne.s32.totalorder %s64, %s66
      %p73 = scmp.eq.s32.totalorder %s23, 2
      %p74 = por %p72, %p73
      %p75 = scmp.ne.s32.totalorder %s66, %s67
      %p76 = scmp.eq.s32.totalorder %s23, 0
      %p77 = por %p75, %p76
      %p78 = scmp.ne.s32.totalorder %s66, %s67
      %p79 = scmp.eq.s32.totalorder %s24, 2
      %p80 = por %p78, %p79
      %p82 = scmp.ne.s32.totalorder %s67, %s81
      %p83 = scmp.eq.s32.totalorder %s24, 0
      %p84 = por %p82, %p83
      %s86 = sadd.s32 %s85, 1
      %p89 = scmp.eq.s32.totalorder %s18, 2
      %p90 = scmp.ne.s32.totalorder %s85, %s87
      %p91 = scmp.eq.s32.totalorder %s18, 0
      %p92 = por %p90, %p91
      %p93 = scmp.ne.s32.totalorder %s85, %s87
      %p94 = scmp.eq.s32.totalorder %s23, 2
      %p95 = por %p93, %p94
      %p96 = scmp.ne.s32.totalorder %s87, %s88
      %p97 = scmp.eq.s32.totalorder %s23, 0
      %p98 = por %p96, %p97
      %p99 = scmp.ne.s32.totalorder %s87, %s88
      %p100 = scmp.eq.s32.totalorder %s24, 2
      %p101 = por %p99, %p100
      %p103 = scmp.ne.s32.totalorder %s88, %s102
      %p104 = scmp.eq.s32.totalorder %s24, 0
      %p105 = por %p103, %p104
      %s107 = sadd.s32 %s106, 1
      %p110 = scmp.eq.s32.totalorder %s18, 2
      %p111 = scmp.ne.s32.totalorder %s106, %s108
      %p112 = scmp.eq.s32.totalorder %s18, 0
      %p113 = por %p111, %p112
      %p114 = scmp.ne.s32.totalorder %s106, %s108
      %p115 = scmp.eq.s32.totalorder %s23, 2
      %p116 = por %p114, %p115
      %p117 = scmp.ne.s32.totalorder %s108, %s109
      %p118 = scmp.eq.s32.totalorder %s23, 0
      %p119 = por %p117, %p118
      %p120 = scmp.ne.s32.totalorder %s108, %s109
      %p121 = scmp.eq.s32.totalorder %s24, 2
      %p122 = por %p120, %p121
      %p124 = scmp.ne.s32.totalorder %s109, %s123
      %p125 = scmp.eq.s32.totalorder %s24, 0
      %p126 = por %p124, %p125
      %s127 = ssub.s32 %s25, %s37
      %p128 = scmp.eq.s32.totalorder %s127, 0
      %s130 = sadd.s32 %s129, 1
      %s131 = scalar_select %p128, %s129, %s130
      %p134 = pneg %p128
      %p135 = scmp.eq.s32.totalorder %s18, 2
      %p136 = por %p134, %p135
      %p137 = scmp.ne.s32.totalorder %s129, %s132
      %p138 = scmp.eq.s32.totalorder %s18, 0
      %p139 = por %p137, %p138
      %p140 = scmp.ne.s32.totalorder %s129, %s132
      %p141 = scmp.eq.s32.totalorder %s23, 2
      %p142 = por %p140, %p141
      %p143 = scmp.ne.s32.totalorder %s132, %s133
      %p144 = scmp.eq.s32.totalorder %s23, 0
      %p145 = por %p143, %p144
      %p146 = scmp.ne.s32.totalorder %s132, %s133
      %p147 = scmp.eq.s32.totalorder %s24, 2
      %p148 = por %p146, %p147
      %p150 = scmp.ne.s32.totalorder %s133, %s149
      %p151 = scmp.eq.s32.totalorder %s24, 0
      %p152 = por %p150, %p151
      %s153 = ssub.s32 %s26, %s33
      %s154 = ssub.s32 %s25, %s37
      %s155 = sor.u32 %s153, %s154
      %p156 = scmp.eq.s32.totalorder %s155, 0
      %s158 = sadd.s32 %s157, 1
      %s159 = scalar_select %p156, %s157, %s158
      %p162 = pneg %p156
      %p163 = scmp.eq.s32.totalorder %s18, 2
      %p164 = por %p162, %p163
      %p165 = scmp.ne.s32.totalorder %s157, %s160
      %p166 = scmp.eq.s32.totalorder %s18, 0
      %p167 = por %p165, %p166
      %p168 = scmp.ne.s32.totalorder %s157, %s160
      %p169 = scmp.eq.s32.totalorder %s23, 2
      %p170 = por %p168, %p169
      %p171 = scmp.ne.s32.totalorder %s160, %s161
      %p172 = scmp.eq.s32.totalorder %s23, 0
      %p173 = por %p171, %p172
      %p174 = scmp.ne.s32.totalorder %s160, %s161
      %p175 = scmp.eq.s32.totalorder %s24, 2
      %p176 = por %p174, %p175
      %p178 = scmp.ne.s32.totalorder %s161, %s177
      %p179 = scmp.eq.s32.totalorder %s24, 0
      %p180 = por %p178, %p179
      %p181 = scmp.le.s32.totalorder 1, %s18
      %p182 = scmp.lt.s32.totalorder %s18, 4
      %p183 = pnand %p181, %p182
      %p184 = pneg %p183
      // Predicated region
      $region9: #{tpu_custom_call.1} parent=5 // pred_check
        _
      $region10: #{tpu_custom_call.1} parent=5 // pred_check_branch
        %186 = sbr.rel (%p183) target = $region12
      $region11: #{tpu_custom_call.1} parent=5 // pred_region
        %s187 = ssub.s32 %s18, 1
        // Predicated region
        $region13: #{tpu_custom_call.1} parent=11 // pred_check
          %p188 = pneg %p56
        $region14: #{tpu_custom_call.1} parent=11 // pred_check_branch
          %190 = sbr.rel (%p188) target = $region16
        $region15: #{tpu_custom_call.1} parent=11 // pred_region
          %s192 = ssub.s32 128, 128
          %193 = vsyncadd [#allocation5], %s192
          %s194 = smul.addr %s27, 128
          %s195 = scalar_lea.hbm %s0, %s194
          %s197 = sshll.u32 [#allocation4], 4
          %s198 = int_to_ptr.vmem [resolvable:$true] %s197
          %200 = dma.hbm_to_vmem [thread:$0]  %s195, 128, %s198, [#allocation5]
        $region16: #{tpu_custom_call.1} parent=11 // pred_fallthru
          _
        // Predicated region
        $region17: #{tpu_custom_call.1} parent=11 // pred_check
          %p201 = pneg %p77
        $region18: #{tpu_custom_call.1} parent=11 // pred_check_branch
          %203 = sbr.rel (%p201) target = $region20
        $region19: #{tpu_custom_call.1} parent=11 // pred_region
          %s205 = ssub.s32 2048, 2048
          %206 = vsyncadd [#allocation8], %s205
          %s207 = sshll.u32 [#allocation7], 4
          %s208 = int_to_ptr.vmem [resolvable:$true] %s207
          %213 = dma.hbm_to_vmem [thread:$0]  %s1, 2048, %s208, [#allocation8], 128, 128, 8
        $region20: #{tpu_custom_call.1} parent=11 // pred_fallthru
          _
        // Predicated region
        $region21: #{tpu_custom_call.1} parent=11 // pred_check
          %p214 = pneg %p98
        $region22: #{tpu_custom_call.1} parent=11 // pred_check_branch
          %216 = sbr.rel (%p214) target = $region24
        $region23: #{tpu_custom_call.1} parent=11 // pred_region
          %s218 = ssub.s32 2048, 2048
          %219 = vsyncadd [#allocation8], %s218
          %s220 = sshll.u32 [#allocation9], 4
          %s221 = int_to_ptr.vmem [resolvable:$true] %s220
          %226 = dma.hbm_to_vmem [thread:$0]  %s2, 2048, %s221, [#allocation8], 128, 128, 8
        $region24: #{tpu_custom_call.1} parent=11 // pred_fallthru
          _
        // Predicated region
        $region25: #{tpu_custom_call.1} parent=11 // pred_check
          %p227 = pneg %p119
        $region26: #{tpu_custom_call.1} parent=11 // pred_check_branch
          %229 = sbr.rel (%p227) target = $region28
        $region27: #{tpu_custom_call.1} parent=11 // pred_region
          _
        $region28: #{tpu_custom_call.1} parent=11 // pred_fallthru
          _
      $region12: #{tpu_custom_call.1} parent=5 // pred_fallthru
        _
      %p230 = scmp.lt.s32.totalorder %s18, 3
      // Predicated region
      $region29: #{tpu_custom_call.1} parent=5 // pred_check
        %p231 = pneg %p230
      $region30: #{tpu_custom_call.1} parent=5 // pred_check_branch
        %233 = sbr.rel (%p231) target = $region32
      $region31: #{tpu_custom_call.1} parent=5 // pred_region
        _
      $region32: #{tpu_custom_call.1} parent=5 // pred_fallthru
        _
      %p234 = scmp.le.s32.totalorder 1, %s18
      %p235 = scmp.lt.s32.totalorder %s18, 4
      %p236 = pnand %p234, %p235
      %p237 = pneg %p236
      // Predicated region
      $region33: #{tpu_custom_call.1} parent=5 // pred_check
        _
      $region34: #{tpu_custom_call.1} parent=5 // pred_check_branch
        %239 = sbr.rel (%p236) target = $region36
      $region35: #{tpu_custom_call.1} parent=5 // pred_region
        %s240 = ssub.s32 %s18, 1
        // Predicated region
        $region37: #{tpu_custom_call.1} parent=35 // pred_check
          %p241 = pneg %p56
        $region38: #{tpu_custom_call.1} parent=35 // pred_check_branch
          %243 = sbr.rel (%p241) target = $region40
        $region39: #{tpu_custom_call.1} parent=35 // pred_region
          %244 = dma.done [#allocation5], 128
        $region40: #{tpu_custom_call.1} parent=35 // pred_fallthru
          _
        // Predicated region
        $region41: #{tpu_custom_call.1} parent=35 // pred_check
          %p245 = pneg %p77
        $region42: #{tpu_custom_call.1} parent=35 // pred_check_branch
          %247 = sbr.rel (%p245) target = $region44
        $region43: #{tpu_custom_call.1} parent=35 // pred_region
          %248 = dma.done [#allocation8], 2048
        $region44: #{tpu_custom_call.1} parent=35 // pred_fallthru
          _
        // Predicated region
        $region45: #{tpu_custom_call.1} parent=35 // pred_check
          %p249 = pneg %p98
        $region46: #{tpu_custom_call.1} parent=35 // pred_check_branch
          %251 = sbr.rel (%p249) target = $region48
        $region47: #{tpu_custom_call.1} parent=35 // pred_region
          %252 = dma.done [#allocation8], 2048
        $region48: #{tpu_custom_call.1} parent=35 // pred_fallthru
          _
        %p253 = pneg %p56
        %p254 = pneg %p53
        %p255 = pneg %p77
        %p256 = pneg %p74
        %p257 = pneg %p98
        %p258 = pneg %p95
        %p259 = pneg %p119
        %p260 = pneg %p116
        %p261 = pneg %p145
        %p262 = pneg %p142
        %p263 = pneg %p173
        %p264 = pneg %p170
        %s265 = sand.u32 %s160, 1
        %s266 = scalar_lea.sflag [#allocation12], %s265
        %s267 = sand.u32 %s160, 1
        %s268 = smul.addr %s267, 8
        %s269 = scalar_lea.vmem [#allocation11], %s268
        %p270 = scmp.eq.s32.totalorder %s28, 0
        // Predicated region
        $region49: #{tpu_custom_call.1} parent=35 // pred_check
          %p271 = pneg %p270
        $region50: #{tpu_custom_call.1} parent=35 // pred_check_branch
          %273 = sbr.rel (%p271) target = $region52
        $region51: #{tpu_custom_call.1} parent=35 // pred_region
          %v274 = vld [vmem:[#allocation4] sm:$0xff]
          %275 = vst [vmem:[#allocation2] sm:$0xff] %v274
          %276 = vst [vmem:[#allocation3] sm:$0xff] 0.0
        $region52: #{tpu_custom_call.1} parent=35 // pred_fallthru
          _
        %v277 = vld [vmem:[#allocation2] sm:$0xff]
        %v278 = vmul.f32 %v277, %v277
        %279 = vadd.xlane.f32.xlu0 %v278
        %v280 = vpop.xlane.xlu0 %279
        %v281 = vld [vmem:[#allocation9] sm:$0xff]
        %v282 = vld [vmem:[#allocation9 + $0x8] sm:$0xff]
        %v283 = vld [vmem:[#allocation9 + $0x10] sm:$0xff]
        %v284 = vld [vmem:[#allocation9 + $0x18] sm:$0xff]
        %v285 = vld [vmem:[#allocation9 + $0x20] sm:$0xff]
        %v286 = vld [vmem:[#allocation9 + $0x28] sm:$0xff]
        %v287 = vld [vmem:[#allocation9 + $0x30] sm:$0xff]
        %v288 = vld [vmem:[#allocation9 + $0x38] sm:$0xff]
        %v289 = vld [vmem:[#allocation9 + $0x40] sm:$0xff]
        %v290 = vld [vmem:[#allocation9 + $0x48] sm:$0xff]
        %v291 = vld [vmem:[#allocation9 + $0x50] sm:$0xff]
        %v292 = vld [vmem:[#allocation9 + $0x58] sm:$0xff]
        %v293 = vld [vmem:[#allocation9 + $0x60] sm:$0xff]
        %v294 = vld [vmem:[#allocation9 + $0x68] sm:$0xff]
        %v295 = vld [vmem:[#allocation9 + $0x70] sm:$0xff]
        %v296 = vld [vmem:[#allocation9 + $0x78] sm:$0xff]
        %297 = vmatprep.subr.mxu0 0.0
        %298 = vmatpush1.msra.mxu0 %v281
        %299 = vmatprep.subr.mxu0 0.0
        %300 = vmatpush1.msra.mxu0 %v282
        %301 = vmatprep.subr.mxu0 0.0
        %302 = vmatpush1.msra.mxu0 %v283
        %303 = vmatprep.subr.mxu0 0.0
        %304 = vmatpush1.msra.mxu0 %v284
        %305 = vmatprep.subr.mxu0 0.0
        %306 = vmatpush1.msra.mxu0 %v285
        %307 = vmatprep.subr.mxu0 0.0
        %308 = vmatpush1.msra.mxu0 %v286
        %309 = vmatprep.subr.mxu0 0.0
        %310 = vmatpush1.msra.mxu0 %v287
        %311 = vmatprep.subr.mxu0 0.0
        %312 = vmatpush1.msra.mxu0 %v288
        %313 = vmatprep.subr.mxu0 0.0
        %314 = vmatpush1.msra.mxu0 %v289
        %315 = vmatprep.subr.mxu0 0.0
        %316 = vmatpush1.msra.mxu0 %v290
        %317 = vmatprep.subr.mxu0 0.0
        %318 = vmatpush1.msra.mxu0 %v291
        %319 = vmatprep.subr.mxu0 0.0
        %320 = vmatpush1.msra.mxu0 %v292
        %321 = vmatprep.subr.mxu0 0.0
        %322 = vmatpush1.msra.mxu0 %v293
        %323 = vmatprep.subr.mxu0 0.0
        %324 = vmatpush1.msra.mxu0 %v294
        %325 = vmatprep.subr.mxu0 0.0
        %326 = vmatpush1.msra.mxu0 %v295
        %327 = vmatprep.subr.mxu0 0.0
        %328 = vmatpush1.msra.mxu0 %v296
        %329 = vmatprep.subr.mxu0 0.0
        %330 = vmatpush1.msra.mxu0 0.0
        %331 = vmatprep.subr.mxu0 0.0
        %332 = vmatpush1.msra.mxu0 0.0
        %333 = vmatprep.subr.mxu0 0.0
        %334 = vmatpush1.msra.mxu0 0.0
        %335 = vmatprep.subr.mxu0 0.0
        %336 = vmatpush1.msra.mxu0 0.0
        %337 = vmatprep.subr.mxu0 0.0
        %338 = vmatpush1.msra.mxu0 0.0
        %339 = vmatprep.subr.mxu0 0.0
        %340 = vmatpush1.msra.mxu0 0.0
        %341 = vmatprep.subr.mxu0 0.0
        %342 = vmatpush1.msra.mxu0 0.0
        %343 = vmatprep.subr.mxu0 0.0
        %344 = vmatpush1.msra.mxu0 0.0
        %345 = vmatprep.subr.mxu0 0.0
        %346 = vmatpush1.msra.mxu0 0.0
        %347 = vmatprep.subr.mxu0 0.0
        %348 = vmatpush1.msra.mxu0 0.0
        %349 = vmatprep.subr.mxu0 0.0
        %350 = vmatpush1.msra.mxu0 0.0
        %351 = vmatprep.subr.mxu0 0.0
        %352 = vmatpush1.msra.mxu0 0.0
        %353 = vmatprep.subr.mxu0 0.0
        %354 = vmatpush1.msra.mxu0 0.0
        %355 = vmatprep.subr.mxu0 0.0
        %356 = vmatpush1.msra.mxu0 0.0
        %357 = vmatprep.subr.mxu0 0.0
        %358 = vmatpush1.msra.mxu0 0.0
        %359 = vmatprep.subr.mxu0 0.0
        %360 = vmatpush1.msra.mxu0 0.0
        %361 = vmatprep.mubr.f32.mxu0 0.0
        %362 = vmatmul.mubr.f32.gmra.mrb[0].mxu0 %v277
        %v363 = vpop.f32.mrb[0].mxu0
        %v364 = vadd.f32 0.0, %v363
        %v365 = vpop.f32.mrb[0].mxu0
        %366 = vdwg.mxu0
        %v367 = vld [vmem:[%s3] sm:$0x1]
        %v369 = vlaneseq
        %v370 = vshrl.u32 %v369, 7
        %v371 = vsub.s32 0, %v370
        %v372 = vrot.slane %v367, %v371
        %v374 = vadd.f32 %v280, %v372
        %v375 = vadd.f32 %v374, %v364
        %376 = vst [vmem:[%s269] sm:$0xff] %v375
        %v377 = vlaneseq
        %v378 = vand.u32 %v377, 127
        %vm379 = vcmp.lt.s32.totalorder %v378, 16
        %v380 = vsel %vm379, %v375, inf
        %381 = vmin.xlane.f32.xlu0 %v380
        %v382 = vpop.xlane.xlu0 %381
        %vm383 = vcmp.eq.f32.partialorder %v380, %v382
        %v384 = vsel %vm383, %v378, 128
        %v385 = vand.u32 %v384, 65535
        %v386 = vshra.s32 %v384, 16
        %v387 = vcvt.s32.f32 %v385
        %v388 = vcvt.s32.f32 %v386
        %389 = vmin.xlane.f32.xlu0 %v388
        %v390 = vpop.xlane.xlu0 %389
        %vm391 = vcmp.eq.f32.partialorder %v388, %v390
        %v392 = vsel %vm391, %v387, inf
        %393 = vmin.xlane.f32.xlu0 %v392
        %v394 = vpop.xlane.xlu0 %393
        %v395 = vcvt.f32.s32 %v394
        %v396 = vcvt.f32.s32 %v390
        %v397 = vshll.u32 %v396, 16
        %v398 = vadd.s32 %v397, %v395
        %vm399 = vcmp.eq.s32.totalorder %v378, %v398
        %v400 = vsel %vm399, 1, 0
        %v401 = vcvt.s32.f32 %v400
        %v402 = vld [vmem:[#allocation7] sm:$0xff]
        %v403 = vld [vmem:[#allocation7 + $0x8] sm:$0xff]
        %v404 = vld [vmem:[#allocation7 + $0x10] sm:$0xff]
        %v405 = vld [vmem:[#allocation7 + $0x18] sm:$0xff]
        %v406 = vld [vmem:[#allocation7 + $0x20] sm:$0xff]
        %v407 = vld [vmem:[#allocation7 + $0x28] sm:$0xff]
        %v408 = vld [vmem:[#allocation7 + $0x30] sm:$0xff]
        %v409 = vld [vmem:[#allocation7 + $0x38] sm:$0xff]
        %v410 = vld [vmem:[#allocation7 + $0x40] sm:$0xff]
        %v411 = vld [vmem:[#allocation7 + $0x48] sm:$0xff]
        %v412 = vld [vmem:[#allocation7 + $0x50] sm:$0xff]
        %v413 = vld [vmem:[#allocation7 + $0x58] sm:$0xff]
        %v414 = vld [vmem:[#allocation7 + $0x60] sm:$0xff]
        %v415 = vld [vmem:[#allocation7 + $0x68] sm:$0xff]
        %v416 = vld [vmem:[#allocation7 + $0x70] sm:$0xff]
        %v417 = vld [vmem:[#allocation7 + $0x78] sm:$0xff]
        %418 = vmatprep.subr.mxu0 0.0
        %419 = vmatpush1.msra.mxu0 %v402
        %420 = vmatprep.subr.mxu0 0.0
        %421 = vmatpush1.msra.mxu0 %v403
        %422 = vmatprep.subr.mxu0 0.0
        %423 = vmatpush1.msra.mxu0 %v404
        %424 = vmatprep.subr.mxu0 0.0
        %425 = vmatpush1.msra.mxu0 %v405
        %426 = vmatprep.subr.mxu0 0.0
        %427 = vmatpush1.msra.mxu0 %v406
        %428 = vmatprep.subr.mxu0 0.0
        %429 = vmatpush1.msra.mxu0 %v407
        %430 = vmatprep.subr.mxu0 0.0
        %431 = vmatpush1.msra.mxu0 %v408
        %432 = vmatprep.subr.mxu0 0.0
        %433 = vmatpush1.msra.mxu0 %v409
        %434 = vmatprep.subr.mxu0 0.0
        %435 = vmatpush1.msra.mxu0 %v410
        %436 = vmatprep.subr.mxu0 0.0
        %437 = vmatpush1.msra.mxu0 %v411
        %438 = vmatprep.subr.mxu0 0.0
        %439 = vmatpush1.msra.mxu0 %v412
        %440 = vmatprep.subr.mxu0 0.0
        %441 = vmatpush1.msra.mxu0 %v413
        %442 = vmatprep.subr.mxu0 0.0
        %443 = vmatpush1.msra.mxu0 %v414
        %444 = vmatprep.subr.mxu0 0.0
        %445 = vmatpush1.msra.mxu0 %v415
        %446 = vmatprep.subr.mxu0 0.0
        %447 = vmatpush1.msra.mxu0 %v416
        %448 = vmatprep.subr.mxu0 0.0
        %449 = vmatpush1.msra.mxu0 %v417
        %450 = vmatprep.subr.mxu0 0.0
        %451 = vmatpush1.msra.mxu0 0.0
        %452 = vmatprep.subr.mxu0 0.0
        %453 = vmatpush1.msra.mxu0 0.0
        %454 = vmatprep.subr.mxu0 0.0
        %455 = vmatpush1.msra.mxu0 0.0
        %456 = vmatprep.subr.mxu0 0.0
        %457 = vmatpush1.msra.mxu0 0.0
        %458 = vmatprep.subr.mxu0 0.0
        %459 = vmatpush1.msra.mxu0 0.0
        %460 = vmatprep.subr.mxu0 0.0
        %461 = vmatpush1.msra.mxu0 0.0
        %462 = vmatprep.subr.mxu0 0.0
        %463 = vmatpush1.msra.mxu0 0.0
        %464 = vmatprep.subr.mxu0 0.0
        %465 = vmatpush1.msra.mxu0 0.0
        %466 = vmatprep.subr.mxu0 0.0
        %467 = vmatpush1.msra.mxu0 0.0
        %468 = vmatprep.subr.mxu0 0.0
        %469 = vmatpush1.msra.mxu0 0.0
        %470 = vmatprep.subr.mxu0 0.0
        %471 = vmatpush1.msra.mxu0 0.0
        %472 = vmatprep.subr.mxu0 0.0
        %473 = vmatpush1.msra.mxu0 0.0
        %474 = vmatprep.subr.mxu0 0.0
        %475 = vmatpush1.msra.mxu0 0.0
        %476 = vmatprep.subr.mxu0 0.0
        %477 = vmatpush1.msra.mxu0 0.0
        %478 = vmatprep.subr.mxu0 0.0
        %479 = vmatpush1.msra.mxu0 0.0
        %480 = vmatprep.subr.mxu0 0.0
        %481 = vmatpush1.msra.mxu0 0.0
        %482 = vmatprep.mubr.f32.mxu0 0.0
        %483 = vmatmul.mubr.f32.gmra.mrb[0].mxu0 %v401
        %v484 = vpop.f32.mrb[0].mxu0
        %v485 = vadd.f32 0.0, %v484
        %v486 = vpop.f32.mrb[0].mxu0
        %487 = vdwg.mxu0
        %v488 = vld [vmem:[#allocation3] sm:$0xff]
        %v489 = vadd.f32 %v488, %v485
        %490 = vst [vmem:[#allocation3] sm:$0xff] %v489
        %v491 = vsub.f32 %v277, %v485
        %492 = vst [vmem:[#allocation2] sm:$0xff] %v491
        %p493 = scmp.eq.s32.totalorder %s28, 2
        // Predicated region
        $region53: #{tpu_custom_call.1} parent=35 // pred_check
          %p494 = pneg %p493
        $region54: #{tpu_custom_call.1} parent=35 // pred_check_branch
          %496 = sbr.rel (%p494) target = $region56
        $region55: #{tpu_custom_call.1} parent=35 // pred_region
          %v497 = vld [vmem:[#allocation3] sm:$0xff]
          %498 = vst [vmem:[#allocation10] sm:$0xff] %v497
        $region56: #{tpu_custom_call.1} parent=35 // pred_fallthru
          _
        %s499 = sand.u32 %s160, 1
        %s500 = scalar_lea.sflag [#allocation12], %s499
        %s501 = sand.u32 %s160, 1
        %s502 = smul.addr %s501, 8
        %s503 = scalar_lea.vmem [#allocation11], %s502
        // Predicated region
        $region57: #{tpu_custom_call.1} parent=35 // pred_check
          %p504 = pneg %p142
        $region58: #{tpu_custom_call.1} parent=35 // pred_check_branch
          %506 = sbr.rel (%p504) target = $region60
        $region59: #{tpu_custom_call.1} parent=35 // pred_region
          %s508 = ssub.s32 128, 128
          %509 = vsyncadd [#allocation6], %s508
          %s510 = smul.addr %s27, 128
          %s511 = scalar_lea.hbm %s4, %s510
          %s513 = sshll.u32 [#allocation10], 4
          %s514 = int_to_ptr.vmem [resolvable:$true] %s513
          %516 = dma.vmem_to_hbm [thread:$0]  %s514, 128, %s511, [#allocation6]
        $region60: #{tpu_custom_call.1} parent=35 // pred_fallthru
          _
        // Predicated region
        $region61: #{tpu_custom_call.1} parent=35 // pred_check
          %p517 = pneg %p170
        $region62: #{tpu_custom_call.1} parent=35 // pred_check_branch
          %519 = sbr.rel (%p517) target = $region64
        $region63: #{tpu_custom_call.1} parent=35 // pred_region
          %s521 = ssub.s32 128, 128
          %522 = vsyncadd %s500, %s521
          %s523 = sadd.s32 %s27, %s28
          %s524 = smul.addr %s523, 128
          %s525 = scalar_lea.hbm %s5, %s524
          %s527 = sshll.u32 %s503, 4
          %s528 = int_to_ptr.vmem [resolvable:$true] %s527
          %530 = dma.vmem_to_hbm [thread:$0]  %s528, 128, %s525, %s500
        $region64: #{tpu_custom_call.1} parent=35 // pred_fallthru
          _
        // Predicated region
        $region65: #{tpu_custom_call.1} parent=35 // pred_check
          %p531 = pneg %p142
        $region66: #{tpu_custom_call.1} parent=35 // pred_check_branch
          %533 = sbr.rel (%p531) target = $region68
        $region67: #{tpu_custom_call.1} parent=35 // pred_region
          %534 = dma.done [#allocation6], 128
        $region68: #{tpu_custom_call.1} parent=35 // pred_fallthru
          _
      $region36: #{tpu_custom_call.1} parent=5 // pred_fallthru
        _
      %p535 = scmp.le.s32.totalorder 2, %s18
      // Predicated region
      $region69: #{tpu_custom_call.1} parent=5 // pred_check
        %p536 = pneg %p535
      $region70: #{tpu_custom_call.1} parent=5 // pred_check_branch
        %538 = sbr.rel (%p536) target = $region72
      $region71: #{tpu_custom_call.1} parent=5 // pred_region
        %s539 = ssub.s32 %s18, 2
        // Predicated region
        $region73: #{tpu_custom_call.1} parent=71 // pred_check
          %p540 = pneg %p176
        $region74: #{tpu_custom_call.1} parent=71 // pred_check_branch
          %542 = sbr.rel (%p540) target = $region76
        $region75: #{tpu_custom_call.1} parent=71 // pred_region
          %s543 = sand.u32 %s161, 1
          %s544 = scalar_lea.sflag [#allocation12], %s543
          %s545 = sand.u32 %s161, 1
          %s546 = smul.addr %s545, 8
          %s547 = scalar_lea.vmem [#allocation11], %s546
          %548 = dma.done %s544, 128
        $region76: #{tpu_custom_call.1} parent=71 // pred_fallthru
          _
      $region72: #{tpu_custom_call.1} parent=5 // pred_fallthru
        _
    $region6: #{tpu_custom_call.1} parent=1 // loop_footer
      %s22 = sadd.s32 1, %s18
    $region7: #{tpu_custom_call.1} parent=1 // loop_footer_branch
      %17 = sbr.rel target = $region3
    $region8: #{tpu_custom_call.1} parent=1 // loop_exit
      _
    %549 = vsyncpa [#allocation5], 1
    %s550 = scalar_lea.sflag [#allocation5], 1
    %551 = vsyncpa %s550, 1
    %552 = vsyncpa [#allocation8], 1
    %553 = vsyncpa [#allocation6], 1
    %s554 = scalar_lea.sflag [#allocation6], 1
    %555 = vsyncpa %s554, 1
    %556 = vsyncpa [#allocation12], 1
    %s557 = scalar_lea.sflag [#allocation12], 1
    %558 = vsyncpa %s557, 1

</llo_original>
